<compile_context>
chip_gen: v7x
topology: tpu7x:2x2x1
jax: 0.10.0
libtpu: 0.0.40
codegen_flags: <defaults>
</compile_context>

<pallas_src>
import functools
import math

import jax
import jax.numpy as jnp
from jax.experimental import pallas as pl
from jax.experimental.pallas import tpu as pltpu


def _round_up(x: int, m: int) -> int:
    return ((x + m - 1) // m) * m


def _round_down(x: int, m: int) -> int:
    return (x // m) * m


def _postprocess_kernel(logits_ref, tbl_ref, boxes_ref, scores_ref, *, score_thresh):
    # logits_ref: (1, K, TA) channel-major, anchors on the lane axis.
    # tbl_ref:    (6, TA)    rows: [2*stride_x, 2*stride_y,
    #                               (grid_x-0.5)*stride_x, (grid_y-0.5)*stride_y,
    #                               2*anchor_w, 2*anchor_h]
    # boxes_ref:  (1, 4, TA) rows: [x1, y1, x2, y2]
    # scores_ref: (1, C, TA)
    x = logits_ref[0].astype(jnp.float32)      # (K, TA), f32 compute (v5e-safe)
    p = jax.nn.sigmoid(x)                      # EUP transcendental

    a = tbl_ref[0:2]                           # 2 * stride                (2, TA)
    b = tbl_ref[2:4]                           # (grid - 0.5) * stride     (2, TA)
    hw = tbl_ref[4:6]                          # 2 * anchor_wh             (2, TA)

    # Box decode (yolort det_utils.BoxCoder.decode_single), factored:
    #   xy   = (sig_xy*2 - 0.5 + grid) * stride = sig_xy * (2*stride) + (grid-0.5)*stride
    #   wh/2 = ((sig_wh*2)^2 * anchor_wh) / 2   = sig_wh^2 * (2*anchor_wh)
    xy = p[0:2] * a + b                        # (2, TA) centers
    half = jnp.square(p[2:4]) * hw             # (2, TA) half extents

    boxes_ref[0, 0:2] = (xy - half).astype(boxes_ref.dtype)   # x1, y1 rows
    boxes_ref[0, 2:4] = (xy + half).astype(boxes_ref.dtype)   # x2, y2 rows

    # scores = class_conf * objectness, score-threshold applied as a mask BEFORE the cast
    # so thresholded zeros stay exactly zero in any out_dtype.
    obj = p[4:5]                               # (1, TA)
    cls = p[5:]                                # (C, TA)
    sc = cls * obj
    scores_ref[0] = jnp.where(sc > score_thresh, sc, 0.0).astype(scores_ref.dtype)


class PostProcessPallas:
    def __init__(self, score_thresh: float, nms_thresh: float, detections_per_img: int):
        self.score_thresh = float(score_thresh)
        self.nms_thresh = float(nms_thresh)                 # unused (NMS not implemented)
        self.detections_per_img = int(detections_per_img)   # unused (NMS not implemented)

    def __call__(self, head_outputs, anchors_tuple, out_dtype=jnp.bfloat16,
                 vmem_budget_bytes=12 << 20, max_anchor_tile=32768):
        N = head_outputs[0].shape[0]
        K = head_outputs[0].shape[-1]
        C = K - 5
        grid_xy, stride, anchor_wh = anchors_tuple          # each (A_total, 2)

        # --- one channel-major slab over all pyramid levels: (N, K, A_total) ---
        per_level = []
        for h in head_outputs:
            A_l = math.prod(h.shape[1:-1])
            # (N, A_l, K) -> (N, K, A_l); allow_input_fusion below lets XLA fold this copy
            # into the Pallas operand instead of a standalone HBM pass.
            per_level.append(jnp.transpose(h.reshape(N, A_l, K), (0, 2, 1)))
        logits_cm = per_level[0] if len(per_level) == 1 else jnp.concatenate(per_level, axis=-1)
        A_total = logits_cm.shape[-1]

        # Pre-fused decode constants, lane-dense (6, A_total).
        table = jnp.concatenate(
            [2.0 * stride, (grid_xy - 0.5) * stride, 2.0 * anchor_wh], axis=-1
        ).T.astype(jnp.float32)

        # --- anchor-tile selection from a per-step VMEM footprint budget ---
        in_bytes = jnp.dtype(logits_cm.dtype).itemsize
        out_bytes = jnp.dtype(out_dtype).itemsize
        # double-buffered: logits in + table in + boxes out + scores out
        per_anchor_bytes = 2 * (K * in_bytes + 6 * 4 + (4 + C) * out_bytes)
        TA = _round_down(max(vmem_budget_bytes // per_anchor_bytes, 128), 128)
        TA = max(128, min(TA, int(max_anchor_tile), _round_up(A_total, 128)))

        footprint = per_anchor_bytes * TA
        compiler_kwargs = dict(
            dimension_semantics=("parallel", "parallel"),
            allow_input_fusion=[True, True],
        )
        # Stay inside the v5e 16 MiB scoped default when possible; only raise the limit when a
        # larger user budget actually needs it (capped well under v7x's 64 MiB physical VMEM).
        if footprint > (14 << 20):
            compiler_kwargs["vmem_limit_bytes"] = min(int(footprint * 3 // 2), 56 << 20)

        kernel = functools.partial(_postprocess_kernel, score_thresh=self.score_thresh)

        boxes, scores = pl.pallas_call(
            kernel,
            out_shape=(
                jax.ShapeDtypeStruct((N, 4, A_total), out_dtype),
                jax.ShapeDtypeStruct((N, C, A_total), out_dtype),
            ),
            grid_spec=pltpu.PrefetchScalarGridSpec(
                num_scalar_prefetch=0,
                # Long anchor axis leads (megacore shards it on v7x); batch is the inner/fast
                # axis so the table block index is unchanged across batch -> no re-DMA.
                # A_total need not be a multiple of TA: edge blocks are masked on store.
                grid=(pl.cdiv(A_total, TA), N),
                in_specs=[
                    pl.BlockSpec((1, K, TA), lambda a, n: (n, 0, a)),
                    pl.BlockSpec((6, TA), lambda a, n: (0, a)),
                ],
                out_specs=[
                    pl.BlockSpec((1, 4, TA), lambda a, n: (n, 0, a)),
                    pl.BlockSpec((1, C, TA), lambda a, n: (n, 0, a)),
                ],
            ),
            compiler_params=pltpu.CompilerParams(**compiler_kwargs),
        )(logits_cm, table)
        # Channel-major dense outputs: boxes (N, 4, A_total), scores (N, C, A_total).
        return boxes, scores


def _reference(head_outputs, anchors_tuple, score_thresh):
    N = head_outputs[0].shape[0]
    K = head_outputs[0].shape[-1]
    logits = jnp.concatenate([h.reshape(N, -1, K) for h in head_outputs], axis=1)
    grid_xy, stride, anchor_wh = anchors_tuple
    p = jax.nn.sigmoid(logits)
    xy = (p[..., 0:2] * 2.0 - 0.5 + grid_xy[None]) * stride[None]
    wh = jnp.square(p[..., 2:4] * 2.0) * anchor_wh[None]
    boxes = jnp.concatenate([xy - wh * 0.5, xy + wh * 0.5], axis=-1)        # (N, A, 4)
    sc = p[..., 5:] * p[..., 4:5]
    sc = jnp.where(sc > score_thresh, sc, 0.0)
    # Same channel-major layout as the kernel.
    return jnp.transpose(boxes, (0, 2, 1)), jnp.transpose(sc, (0, 2, 1))


if __name__ == "__main__":
    key = jax.random.PRNGKey(0)
    keys = jax.random.split(key, 4)

    # Two small pyramid levels, consistent with the forward:
    # head_outputs[li]: [N, num_anchors_per_loc, H, W, K], K = 5 + num_classes.
    N, na, num_classes = 2, 3, 3
    K = 5 + num_classes
    level_hw = [(8, 8), (4, 4)]
    level_stride = [8.0, 16.0]

    head_outputs = []
    grids, strs, whs = [], [], []
    for li, (H, W) in enumerate(level_hw):
        head_outputs.append(
            jax.random.normal(keys[li], (N, na, H, W, K), dtype=jnp.float32))
        ys, xs = jnp.meshgrid(jnp.arange(H, dtype=jnp.float32),
                              jnp.arange(W, dtype=jnp.float32), indexing="ij")
        cell = jnp.stack([xs, ys], axis=-1).reshape(1, H * W, 2)            # (1, HW, 2)
        A_l = na * H * W
        grids.append(jnp.broadcast_to(cell, (na, H * W, 2)).reshape(A_l, 2))
        strs.append(jnp.full((A_l, 2), level_stride[li], dtype=jnp.float32))
        wh = level_stride[li] * (
            1.0 + jax.random.uniform(keys[2 + li], (na, 1, 2), dtype=jnp.float32))
        whs.append(jnp.broadcast_to(wh, (na, H * W, 2)).reshape(A_l, 2))

    anchors_tuple = (jnp.concatenate(grids, axis=0),
                     jnp.concatenate(strs, axis=0),
                     jnp.concatenate(whs, axis=0))
    A_total = anchors_tuple[0].shape[0]     # 240 -> exercises edge-block lane masking

    post = PostProcessPallas(score_thresh=0.25, nms_thresh=0.45, detections_per_img=100)
    ref_boxes, ref_scores = _reference(head_outputs, anchors_tuple, 0.25)

    # f32 output path: tight numerical check against the pure-JAX reference.
    boxes, scores = post(head_outputs, anchors_tuple, out_dtype=jnp.float32)
    jax.block_until_ready((boxes, scores))
    assert boxes.shape == (N, 4, A_total) and scores.shape == (N, num_classes, A_total)
    assert jnp.allclose(boxes, ref_boxes, atol=2e-4, rtol=1e-5)
    assert jnp.allclose(scores, ref_scores, atol=1e-5, rtol=1e-5)

    # Default bf16 output path (halved output HBM traffic): loose check, zeros stay exact.
    boxes_bf, scores_bf = post(head_outputs, anchors_tuple)
    jax.block_until_ready((boxes_bf, scores_bf))
    assert boxes_bf.dtype == jnp.bfloat16 and scores_bf.dtype == jnp.bfloat16
    assert jnp.allclose(boxes_bf.astype(jnp.float32), ref_boxes, atol=1.0, rtol=1e-2)
    assert jnp.allclose(scores_bf.astype(jnp.float32), ref_scores, atol=1e-2, rtol=1e-2)
    assert jnp.all((scores_bf.astype(jnp.float32) == 0.0) == (ref_scores == 0.0))

    print("KERNEL_OK")
</pallas_src>

<mosaic_0001>
module attributes {stable_mosaic.version = 11 : i64} {
  func.func @_postprocess_kernel(%arg0: i32, %arg1: i32, %arg2: memref<1x8x256xf32, #tpu.memory_space<vmem>>, %arg3: memref<6x256xf32, #tpu.memory_space<vmem>>, %arg4: memref<1x4x256xf32, #tpu.memory_space<vmem>>, %arg5: memref<1x3x256xf32, #tpu.memory_space<vmem>>) attributes {dimension_semantics = [#tpu.dimension_semantics<parallel>, #tpu.dimension_semantics<parallel>], iteration_bounds = array<i64: 1, 2>, scalar_prefetch = 0 : i64, scratch_operands = 0 : i64, tpu.core_type = #tpu.core_type<tc>, window_params = [{transform_indices = @transform_0, window_bounds = array<i64: 1, 8, 256>}, {transform_indices = @transform_1, window_bounds = array<i64: 6, 256>}, {transform_indices = @transform_2, window_bounds = array<i64: 1, 4, 256>}, {transform_indices = @transform_3, window_bounds = array<i64: 1, 3, 256>}]} {
    %c0 = arith.constant 0 : index
    %c0_0 = arith.constant 0 : index
    %c0_1 = arith.constant 0 : index
    %0 = vector.load %arg2[%c0, %c0_0, %c0_1] : memref<1x8x256xf32, #tpu.memory_space<vmem>>, vector<1x8x256xf32>
    %1 = vector.shape_cast %0 : vector<1x8x256xf32> to vector<8x256xf32>
    %2 = arith.negf %1 : vector<8x256xf32>
    %3 = math.exp %2 : vector<8x256xf32>
    %cst = arith.constant 1.000000e+00 : f32
    %4 = vector.broadcast %cst : f32 to vector<8x256xf32>
    %5 = arith.addf %4, %3 : vector<8x256xf32>
    %6 = arith.divf %4, %5 : vector<8x256xf32>
    %c0_2 = arith.constant 0 : index
    %c0_3 = arith.constant 0 : index
    %7 = vector.load %arg3[%c0_2, %c0_3] : memref<6x256xf32, #tpu.memory_space<vmem>>, vector<2x256xf32>
    %c2 = arith.constant 2 : index
    %c0_4 = arith.constant 0 : index
    %8 = vector.load %arg3[%c2, %c0_4] : memref<6x256xf32, #tpu.memory_space<vmem>>, vector<2x256xf32>
    %c4 = arith.constant 4 : index
    %c0_5 = arith.constant 0 : index
    %9 = vector.load %arg3[%c4, %c0_5] : memref<6x256xf32, #tpu.memory_space<vmem>>, vector<2x256xf32>
    %10 = vector.extract_strided_slice %6 {offsets = [0, 0], sizes = [2, 256], strides = [1, 1]} : vector<8x256xf32> to vector<2x256xf32>
    %11 = arith.mulf %10, %7 : vector<2x256xf32>
    %12 = arith.addf %11, %8 : vector<2x256xf32>
    %13 = vector.extract_strided_slice %6 {offsets = [2, 0], sizes = [2, 256], strides = [1, 1]} : vector<8x256xf32> to vector<2x256xf32>
    %14 = arith.mulf %13, %13 : vector<2x256xf32>
    %15 = arith.mulf %14, %9 : vector<2x256xf32>
    %16 = arith.subf %12, %15 : vector<2x256xf32>
    %c0_6 = arith.constant 0 : index
    %c0_7 = arith.constant 0 : index
    %c0_8 = arith.constant 0 : index
    %17 = vector.load %arg4[%c0_6, %c0_7, %c0_8] : memref<1x4x256xf32, #tpu.memory_space<vmem>>, vector<1x2x256xf32>
    %18 = vector.shape_cast %17 : vector<1x2x256xf32> to vector<2x256xf32>
    %19 = vector.shape_cast %16 : vector<2x256xf32> to vector<1x2x256xf32>
    tpu.vector_store %arg4[%c0_6, %c0_7, %c0_8], %19 {strides = array<i32>} : memref<1x4x256xf32, #tpu.memory_space<vmem>>, vector<1x2x256xf32>,
    %20 = arith.addf %12, %15 : vector<2x256xf32>
    %c0_9 = arith.constant 0 : index
    %c2_10 = arith.constant 2 : index
    %c0_11 = arith.constant 0 : index
    %21 = vector.load %arg4[%c0_9, %c2_10, %c0_11] : memref<1x4x256xf32, #tpu.memory_space<vmem>>, vector<1x2x256xf32>
    %22 = vector.shape_cast %21 : vector<1x2x256xf32> to vector<2x256xf32>
    %23 = vector.shape_cast %20 : vector<2x256xf32> to vector<1x2x256xf32>
    tpu.vector_store %arg4[%c0_9, %c2_10, %c0_11], %23 {strides = array<i32>} : memref<1x4x256xf32, #tpu.memory_space<vmem>>, vector<1x2x256xf32>,
    %24 = vector.extract_strided_slice %6 {offsets = [4, 0], sizes = [1, 256], strides = [1, 1]} : vector<8x256xf32> to vector<1x256xf32>
    %25 = vector.extract_strided_slice %6 {offsets = [5, 0], sizes = [3, 256], strides = [1, 1]} : vector<8x256xf32> to vector<3x256xf32>
    %26 = vector.broadcast %24 : vector<1x256xf32> to vector<3x256xf32>
    %27 = arith.mulf %25, %26 : vector<3x256xf32>
    %cst_12 = arith.constant 2.500000e-01 : f32
    %28 = vector.broadcast %cst_12 : f32 to vector<3x256xf32>
    %29 = arith.cmpf ogt, %27, %28 : vector<3x256xf32>
    %cst_13 = arith.constant 0.000000e+00 : f32
    %30 = vector.broadcast %cst_13 : f32 to vector<3x256xf32>
    %31 = arith.select %29, %27, %30 : vector<3x256xi1>, vector<3x256xf32>
    %c0_14 = arith.constant 0 : index
    %c0_15 = arith.constant 0 : index
    %c0_16 = arith.constant 0 : index
    %32 = vector.load %arg5[%c0_14, %c0_15, %c0_16] : memref<1x3x256xf32, #tpu.memory_space<vmem>>, vector<1x3x256xf32>
    %33 = vector.shape_cast %32 : vector<1x3x256xf32> to vector<3x256xf32>
    %34 = vector.shape_cast %31 : vector<3x256xf32> to vector<1x3x256xf32>
    tpu.vector_store %arg5[%c0_14, %c0_15, %c0_16], %34 {strides = array<i32>} : memref<1x3x256xf32, #tpu.memory_space<vmem>>, vector<1x3x256xf32>,
    return
  }
  func.func @transform_0(%arg0: i32, %arg1: i32) -> (i32, i32, i32) {
    %c0_i32 = arith.constant 0 : i32
    %c0_i32_0 = arith.constant 0 : i32
    return %arg1, %c0_i32, %arg0 : i32, i32, i32
  }
  func.func @transform_1(%arg0: i32, %arg1: i32) -> (i32, i32) {
    %c0_i32 = arith.constant 0 : i32
    %c0_i32_0 = arith.constant 0 : i32
    return %c0_i32, %arg0 : i32, i32
  }
  func.func @transform_2(%arg0: i32, %arg1: i32) -> (i32, i32, i32) {
    %c0_i32 = arith.constant 0 : i32
    %c0_i32_0 = arith.constant 0 : i32
    return %arg1, %c0_i32, %arg0 : i32, i32, i32
  }
  func.func @transform_3(%arg0: i32, %arg1: i32) -> (i32, i32, i32) {
    %c0_i32 = arith.constant 0 : i32
    %c0_i32_0 = arith.constant 0 : i32
    return %arg1, %c0_i32, %arg0 : i32, i32, i32
  }
}

</mosaic_0001>

<llo_original>
// kernel: tpu_custom_call.1
$region0: #{tpu_custom_call.1}
  #allocation0 [shape = 'u32[]', space=smem, size = 0x4, offset = 0x4, fixed_abs, tag = 'smem constant byte address 0x4 - core index']
  #allocation1 [shape = 'u32[144,128]{1,0:T(1,128)}', space=vmem, size = 0x12000, scoped, tag = 'internal scratch']
  %s0 = inlined_call_operand.hbm [shape: f32[2,8,240], index: 0, kind: input, shape index: {}]
  %s1 = inlined_call_operand.hbm [shape: f32[6,240], index: 1, kind: input, shape index: {}]
  %s2 = inlined_call_operand.hbm [shape: f32[2,4,240], index: 2, kind: output, shape index: {0}]
  %s3 = inlined_call_operand.vmem [shape: f32[2,3,240], index: 3, kind: output, shape index: {1}]
  %4 = xla_tuple %s2, %s3
  %s5 = sld [smem:[#allocation0]]
  $region57: #{tpu_custom_call.1} parent=0
    _
  %s7 = ssub.s32 1, %s5
  %s8 = scalar_select 0, %s7, %s5
  $region1: #{tpu_custom_call.1} parent=0
    #allocation2 [shape = 'u8[16384]{0}', space=vmem, size = 0x4000, scoped, tag = 'input window, operand 0']
    #allocation3 [shape = 's32[2]{0}', space=sflag, size = 0x8, scoped, tag = 'scoped memory for tpu_custom_call.1']
    #allocation4 [shape = 's32[2]{0}', space=sflag, size = 0x8, scoped, tag = 'scoped memory for tpu_custom_call.1']
    #allocation5 [shape = 'u8[8192]{0}', space=vmem, size = 0x2000, scoped, tag = 'input window, operand 1, single buffered']
    #allocation6 [shape = 's32[1]{0}', space=sflag, size = 0x4, scoped, tag = 'scoped memory for tpu_custom_call.1']
    #allocation7 [shape = 'u8[8192]{0}', space=vmem, size = 0x2000, scoped, tag = 'output window, operand 0']
    %9 = vsyncpa [#allocation3], 0
    %s10 = scalar_lea.sflag [#allocation3], 1
    %11 = vsyncpa %s10, 0
    %12 = vsyncpa [#allocation6], 0
    %13 = vsyncpa [#allocation4], 0
    %s14 = scalar_lea.sflag [#allocation4], 1
    %15 = vsyncpa %s14, 0
    loop: start=0, step=1, limit=4
    $region2: #{tpu_custom_call.1} parent=1 // loop_pre_header
      _
    $region3: #{tpu_custom_call.1} parent=1 // loop_header
      %s17 = sphi 0, %s21
      %p18 = scmp.ge.s32.totalorder %s17, 4
      %s24 = sphi 0, %s36
      %s25 = sphi 0, %s32
      %s26 = sphi 0, %s24
      %s27 = sphi 0, %s25
      %s28 = sphi 0, %s26
      %s29 = sphi 0, %s27
      %s41 = sphi 0, %s43
      %s44 = sphi 0, %s41
      %s45 = sphi 0, %s44
      %s61 = sphi 0, %s45
      %s67 = sphi 0, %s69
      %s70 = sphi 0, %s67
      %s71 = sphi 0, %s70
      %s87 = sphi 0, %s71
      %s95 = sphi 0, %s97
      %s98 = sphi 0, %s95
      %s99 = sphi 0, %s98
      %s115 = sphi 0, %s99
      %s123 = sphi 0, %s125
      %s126 = sphi 0, %s123
      %s127 = sphi 0, %s126
      %s143 = sphi 0, %s127
    $region4: #{tpu_custom_call.1} parent=1 // loop_header_branch
      %20 = sbr.rel (%p18) target = $region8
    $region5: #{tpu_custom_call.1} parent=1 // loop_body
      %s22 = ssub.s32 %s17, 1
      %s23 = ssub.s32 %s17, 2
      %s30 = sadd.s32 1, %s25
      %p31 = scmp.ge.s32.totalorder %s30, 2
      %s32 = scalar_select %p31, 0, %s30
      %s33 = sadd.s32 1, %s24
      %s34 = scalar_select %p31, %s33, %s24
      %p35 = scmp.ge.s32.totalorder %s34, 1
      %s36 = scalar_select %p35, 0, %s34
      %s37 = ssub.s32 %s25, %s32
      %s38 = ssub.s32 %s24, %s36
      %s39 = sor.u32 %s37, %s38
      %p40 = scmp.eq.s32.totalorder %s39, 0
      %s42 = sadd.s32 %s41, 1
      %s43 = scalar_select %p40, %s41, %s42
      %p46 = pneg %p40
      %p47 = scmp.eq.s32.totalorder %s17, 1
      %p48 = por %p46, %p47
      %p49 = scmp.ne.s32.totalorder %s41, %s44
      %p50 = scmp.eq.s32.totalorder %s17, 0
      %p51 = por %p49, %p50
      %p52 = scmp.ne.s32.totalorder %s41, %s44
      %p53 = scmp.eq.s32.totalorder %s22, 1
      %p54 = por %p52, %p53
      %p55 = scmp.ne.s32.totalorder %s44, %s45
      %p56 = scmp.eq.s32.totalorder %s22, 0
      %p57 = por %p55, %p56
      %p58 = scmp.ne.s32.totalorder %s44, %s45
      %p59 = scmp.eq.s32.totalorder %s23, 1
      %p60 = por %p58, %p59
      %p62 = scmp.ne.s32.totalorder %s45, %s61
      %p63 = scmp.eq.s32.totalorder %s23, 0
      %p64 = por %p62, %p63
      %s65 = ssub.s32 %s24, %s36
      %p66 = scmp.eq.s32.totalorder %s65, 0
      %s68 = sadd.s32 %s67, 1
      %s69 = scalar_select %p66, %s67, %s68
      %p72 = pneg %p66
      %p73 = scmp.eq.s32.totalorder %s17, 1
      %p74 = por %p72, %p73
      %p75 = scmp.ne.s32.totalorder %s67, %s70
      %p76 = scmp.eq.s32.totalorder %s17, 0
      %p77 = por %p75, %p76
      %p78 = scmp.ne.s32.totalorder %s67, %s70
      %p79 = scmp.eq.s32.totalorder %s22, 1
      %p80 = por %p78, %p79
      %p81 = scmp.ne.s32.totalorder %s70, %s71
      %p82 = scmp.eq.s32.totalorder %s22, 0
      %p83 = por %p81, %p82
      %p84 = scmp.ne.s32.totalorder %s70, %s71
      %p85 = scmp.eq.s32.totalorder %s23, 1
      %p86 = por %p84, %p85
      %p88 = scmp.ne.s32.totalorder %s71, %s87
      %p89 = scmp.eq.s32.totalorder %s23, 0
      %p90 = por %p88, %p89
      %s91 = ssub.s32 %s25, %s32
      %s92 = ssub.s32 %s24, %s36
      %s93 = sor.u32 %s91, %s92
      %p94 = scmp.eq.s32.totalorder %s93, 0
      %s96 = sadd.s32 %s95, 1
      %s97 = scalar_select %p94, %s95, %s96
      %p100 = pneg %p94
      %p101 = scmp.eq.s32.totalorder %s17, 1
      %p102 = por %p100, %p101
      %p103 = scmp.ne.s32.totalorder %s95, %s98
      %p104 = scmp.eq.s32.totalorder %s17, 0
      %p105 = por %p103, %p104
      %p106 = scmp.ne.s32.totalorder %s95, %s98
      %p107 = scmp.eq.s32.totalorder %s22, 1
      %p108 = por %p106, %p107
      %p109 = scmp.ne.s32.totalorder %s98, %s99
      %p110 = scmp.eq.s32.totalorder %s22, 0
      %p111 = por %p109, %p110
      %p112 = scmp.ne.s32.totalorder %s98, %s99
      %p113 = scmp.eq.s32.totalorder %s23, 1
      %p114 = por %p112, %p113
      %p116 = scmp.ne.s32.totalorder %s99, %s115
      %p117 = scmp.eq.s32.totalorder %s23, 0
      %p118 = por %p116, %p117
      %s119 = ssub.s32 %s25, %s32
      %s120 = ssub.s32 %s24, %s36
      %s121 = sor.u32 %s119, %s120
      %p122 = scmp.eq.s32.totalorder %s121, 0
      %s124 = sadd.s32 %s123, 1
      %s125 = scalar_select %p122, %s123, %s124
      %p128 = pneg %p122
      %p129 = scmp.eq.s32.totalorder %s17, 1
      %p130 = por %p128, %p129
      %p131 = scmp.ne.s32.totalorder %s123, %s126
      %p132 = scmp.eq.s32.totalorder %s17, 0
      %p133 = por %p131, %p132
      %p134 = scmp.ne.s32.totalorder %s123, %s126
      %p135 = scmp.eq.s32.totalorder %s22, 1
      %p136 = por %p134, %p135
      %p137 = scmp.ne.s32.totalorder %s126, %s127
      %p138 = scmp.eq.s32.totalorder %s22, 0
      %p139 = por %p137, %p138
      %p140 = scmp.ne.s32.totalorder %s126, %s127
      %p141 = scmp.eq.s32.totalorder %s23, 1
      %p142 = por %p140, %p141
      %p144 = scmp.ne.s32.totalorder %s127, %s143
      %p145 = scmp.eq.s32.totalorder %s23, 0
      %p146 = por %p144, %p145
      %p147 = scmp.le.s32.totalorder 1, %s17
      %p148 = scmp.lt.s32.totalorder %s17, 3
      %p149 = pnand %p147, %p148
      %p150 = pneg %p149
      // Predicated region
      $region9: #{tpu_custom_call.1} parent=5 // pred_check
        _
      $region10: #{tpu_custom_call.1} parent=5 // pred_check_branch
        %152 = sbr.rel (%p149) target = $region12
      $region11: #{tpu_custom_call.1} parent=5 // pred_region
        %s153 = ssub.s32 %s17, 1
        // Predicated region
        $region13: #{tpu_custom_call.1} parent=11 // pred_check
          %p154 = pneg %p83
        $region14: #{tpu_custom_call.1} parent=11 // pred_check_branch
          %156 = sbr.rel (%p154) target = $region16
        $region15: #{tpu_custom_call.1} parent=11 // pred_region
          %s157 = smul.u32 2, %s26
          %s159 = ssub.s32 256, 256
          %160 = vsyncadd [#allocation6], %s159
          %s161 = smul.addr %s157, 128
          %s162 = scalar_lea.hbm %s1, %s161
          %s164 = sshll.u32 [#allocation5], 4
          %s165 = int_to_ptr.vmem [resolvable:$true] %s164
          %167 = dma.hbm_to_vmem [thread:$0]  %s162, 256, %s165, [#allocation6]
        $region16: #{tpu_custom_call.1} parent=11 // pred_fallthru
          _
      $region12: #{tpu_custom_call.1} parent=5 // pred_fallthru
        _
      %p168 = scmp.lt.s32.totalorder %s17, 2
      // Predicated region
      $region17: #{tpu_custom_call.1} parent=5 // pred_check
        %p169 = pneg %p168
      $region18: #{tpu_custom_call.1} parent=5 // pred_check_branch
        %171 = sbr.rel (%p169) target = $region20
      $region19: #{tpu_custom_call.1} parent=5 // pred_region
        // Predicated region
        $region21: #{tpu_custom_call.1} parent=19 // pred_check
          %p172 = pneg %p51
        $region22: #{tpu_custom_call.1} parent=19 // pred_check_branch
          %174 = sbr.rel (%p172) target = $region24
        $region23: #{tpu_custom_call.1} parent=19 // pred_region
          %s175 = sand.u32 %s41, 1
          %s176 = scalar_lea.sflag [#allocation3], %s175
          %s177 = sand.u32 %s41, 1
          %s178 = smul.addr %s177, 16
          %s179 = scalar_lea.vmem [#allocation2], %s178
          %s180 = smul.u32 2, %s24
          %s182 = ssub.s32 256, 256
          %183 = vsyncadd %s176, %s182
          %s184 = smul.addr %s25, 2
          %s185 = sadd.s32 %s180, %s184
          %s186 = smul.addr %s185, 128
          %s187 = scalar_lea.hbm %s0, %s186
          %s189 = sshll.u32 %s179, 4
          %s190 = int_to_ptr.vmem [resolvable:$true] %s189
          %192 = dma.hbm_to_vmem [thread:$0]  %s187, 256, %s190, %s176
        $region24: #{tpu_custom_call.1} parent=19 // pred_fallthru
          _
      $region20: #{tpu_custom_call.1} parent=5 // pred_fallthru
        _
      %p193 = scmp.le.s32.totalorder 1, %s17
      %p194 = scmp.lt.s32.totalorder %s17, 3
      %p195 = pnand %p193, %p194
      %p196 = pneg %p195
      // Predicated region
      $region25: #{tpu_custom_call.1} parent=5 // pred_check
        _
      $region26: #{tpu_custom_call.1} parent=5 // pred_check_branch
        %198 = sbr.rel (%p195) target = $region28
      $region27: #{tpu_custom_call.1} parent=5 // pred_region
        %s199 = ssub.s32 %s17, 1
        %s200 = sand.u32 %s44, 1
        %s201 = scalar_lea.sflag [#allocation3], %s200
        %s202 = sand.u32 %s44, 1
        %s203 = smul.addr %s202, 16
        %s204 = scalar_lea.vmem [#allocation2], %s203
        // Predicated region
        $region29: #{tpu_custom_call.1} parent=27 // pred_check
          %p205 = pneg %p57
        $region30: #{tpu_custom_call.1} parent=27 // pred_check_branch
          %207 = sbr.rel (%p205) target = $region32
        $region31: #{tpu_custom_call.1} parent=27 // pred_region
          %208 = dma.done %s201, 256
        $region32: #{tpu_custom_call.1} parent=27 // pred_fallthru
          _
        // Predicated region
        $region33: #{tpu_custom_call.1} parent=27 // pred_check
          %p209 = pneg %p83
        $region34: #{tpu_custom_call.1} parent=27 // pred_check_branch
          %211 = sbr.rel (%p209) target = $region36
        $region35: #{tpu_custom_call.1} parent=27 // pred_region
          %212 = dma.done [#allocation6], 256
        $region36: #{tpu_custom_call.1} parent=27 // pred_fallthru
          _
        %s213 = sand.u32 %s44, 1
        %s214 = scalar_lea.sflag [#allocation3], %s213
        %s215 = sand.u32 %s44, 1
        %s216 = smul.addr %s215, 16
        %s217 = scalar_lea.vmem [#allocation2], %s216
        %p218 = pneg %p57
        %p219 = pneg %p54
        %p220 = pneg %p83
        %p221 = pneg %p80
        %p222 = pneg %p111
        %p223 = pneg %p108
        %s224 = sand.u32 %s98, 1
        %s225 = scalar_lea.sflag [#allocation4], %s224
        %s226 = sand.u32 %s98, 1
        %s227 = smul.addr %s226, 8
        %s228 = scalar_lea.vmem [#allocation7], %s227
        %p229 = pneg %p139
        %p230 = pneg %p136
        %s231 = smul.u32 2, %s26
        %p232 = scmp.lt.s32.totalorder %s27, 1
        %s233 = scalar_select %p232, %s27, 1
        %p234 = scmp.lt.s32.totalorder %s231, 1
        %s235 = scalar_select %p234, %s231, 1
        %s236 = smul.addr %s233, 2
        %s237 = sadd.s32 %s235, %s236
        %s238 = smul.addr %s237, 4
        %s239 = scalar_lea.vmem %s3, %s238
        %s240 = smul.u32 2, %s26
        %s241 = smul.u32 2, %s26
        %s242 = smul.u32 2, %s26
        %s243 = smul.u32 2, %s26
        %p244 = scmp.lt.s32.totalorder %s27, 1
        %s245 = scalar_select %p244, %s27, 1
        %p246 = scmp.lt.s32.totalorder %s243, 1
        %s247 = scalar_select %p246, %s243, 1
        %s248 = smul.addr %s245, 2
        %s249 = sadd.s32 %s247, %s248
        %s250 = smul.addr %s249, 4
        %s251 = scalar_lea.vmem %s3, %s250
        %s252 = smul.u32 2, %s26
        %v253 = vld [vmem:[%s204] sm:$0xff]
        %v254 = vld [vmem:[%s204 + $0x8] sm:$0xff]
        %v255 = vxor.u32 %v253, 2147483648
        %v256 = vxor.u32 %v254, 2147483648
        %v257 = vmul.f32 %v255, 1.442695
        %v258 = vpow.pop %v257
        %v259 = vmul.f32 %v256, 1.442695
        %v260 = vpow.pop %v259
        %v261 = vadd.f32 %v258, 1.0
        %v262 = vadd.f32 %v260, 1.0
        %v263 = vrcp.pop %v261
        %v264 = vmul.f32 1.0, %v263
        %v265 = vrcp.pop %v262
        %v266 = vmul.f32 1.0, %v265
        %v267 = vld [vmem:[#allocation5] sm:$0x3]
        %v268 = vld [vmem:[#allocation5 + $0x8] sm:$0x3]
        %v269 = vld [vmem:[#allocation5] sm:$0xc]
        %v270 = vld [vmem:[#allocation5 + $0x8] sm:$0xc]
        %v271 = vld [vmem:[#allocation5] sm:$0x30]
        %v272 = vld [vmem:[#allocation5 + $0x8] sm:$0x30]
        %v273 = vmul.f32 %v264, %v267
        %v274 = vmul.f32 %v266, %v268
        %v277 = vrot.slane %v269, 2
        %v278 = vrot.slane %v270, 2
        %v281 = vadd.f32 %v273, %v277
        %v282 = vadd.f32 %v274, %v278
        %v283 = vmul.f32 %v264, %v264
        %v284 = vmul.f32 %v266, %v266
        %v287 = vrot.slane %v271, 2
        %v288 = vrot.slane %v272, 2
        %v291 = vmul.f32 %v283, %v287
        %v292 = vmul.f32 %v284, %v288
        %v295 = vrot.slane %v291, 2
        %v296 = vrot.slane %v292, 2
        %v299 = vsub.f32 %v281, %v295
        %v300 = vsub.f32 %v282, %v296
        %v303 = vcombine.low %v299, %v300
        %305 = vst [vmem:[%s228] sm:$0x33] %v303
        %v306 = vadd.f32 %v281, %v295
        %v307 = vadd.f32 %v282, %v296
        %v310 = vcombine.low %v306, %v307
        %v311 = vrot.slane %v310, 6
        %313 = vst [vmem:[%s228] sm:$0xcc] %v311
        %v314 = vlaneseq
        %v315 = vshrl.u32 %v314, 7
        %v316 = vsub.s32 4, %v315
        %v317 = vrot.slane %v264, %v316
        %v318 = vlaneseq
        %v319 = vshrl.u32 %v318, 7
        %v320 = vsub.s32 4, %v319
        %v321 = vrot.slane %v266, %v320
        %v322 = vmul.f32 %v264, %v317
        %v323 = vmul.f32 %v266, %v321
        %vm324 = vcmp.gt.f32.partialorder %v322, 0.25
        %vm325 = vcmp.gt.f32.partialorder %v323, 0.25
        %v326 = vsel %vm324, %v322, 0.0
        %v327 = vsel %vm325, %v323, 0.0
        %v330 = vcombine.high %v326, %v327
        %v331 = vrot.slane %v330, 5
        %v332 = vrot.slane %v331, 4
        %334 = vst [vmem:[%s251] sm:$0x77] %v332
        %s335 = sand.u32 %s98, 1
        %s336 = scalar_lea.sflag [#allocation4], %s335
        %s337 = sand.u32 %s98, 1
        %s338 = smul.addr %s337, 8
        %s339 = scalar_lea.vmem [#allocation7], %s338
        %s340 = smul.u32 2, %s26
        %p341 = scmp.lt.s32.totalorder %s27, 1
        %s342 = scalar_select %p341, %s27, 1
        %p343 = scmp.lt.s32.totalorder %s340, 1
        %s344 = scalar_select %p343, %s340, 1
        %s345 = smul.addr %s342, 2
        %s346 = sadd.s32 %s344, %s345
        %s347 = smul.addr %s346, 4
        %s348 = scalar_lea.vmem %s3, %s347
        // Predicated region
        $region37: #{tpu_custom_call.1} parent=27 // pred_check
          %p349 = pneg %p108
        $region38: #{tpu_custom_call.1} parent=27 // pred_check_branch
          %351 = sbr.rel (%p349) target = $region40
        $region39: #{tpu_custom_call.1} parent=27 // pred_region
          %s352 = smul.u32 2, %s26
          %s354 = ssub.s32 128, 128
          %355 = vsyncadd %s336, %s354
          %s356 = smul.addr %s27, 2
          %s357 = sadd.s32 %s352, %s356
          %s358 = smul.addr %s357, 64
          %s359 = scalar_lea.hbm %s2, %s358
          %s361 = sshll.u32 %s339, 4
          %s362 = int_to_ptr.vmem [resolvable:$true] %s361
          %364 = dma.vmem_to_hbm [thread:$0]  %s362, 128, %s359, %s336
        $region40: #{tpu_custom_call.1} parent=27 // pred_fallthru
          _
        // Predicated region
        $region41: #{tpu_custom_call.1} parent=27 // pred_check
          %p365 = pneg %p136
        $region42: #{tpu_custom_call.1} parent=27 // pred_check_branch
          %367 = sbr.rel (%p365) target = $region44
        $region43: #{tpu_custom_call.1} parent=27 // pred_region
          %s368 = smul.u32 2, %s26
        $region44: #{tpu_custom_call.1} parent=27 // pred_fallthru
          _
      $region28: #{tpu_custom_call.1} parent=5 // pred_fallthru
        _
      %p369 = scmp.le.s32.totalorder 2, %s17
      // Predicated region
      $region45: #{tpu_custom_call.1} parent=5 // pred_check
        %p370 = pneg %p369
      $region46: #{tpu_custom_call.1} parent=5 // pred_check_branch
        %372 = sbr.rel (%p370) target = $region48
      $region47: #{tpu_custom_call.1} parent=5 // pred_region
        %s373 = ssub.s32 %s17, 2
        // Predicated region
        $region49: #{tpu_custom_call.1} parent=47 // pred_check
          %p374 = pneg %p114
        $region50: #{tpu_custom_call.1} parent=47 // pred_check_branch
          %376 = sbr.rel (%p374) target = $region52
        $region51: #{tpu_custom_call.1} parent=47 // pred_region
          %s377 = sand.u32 %s99, 1
          %s378 = scalar_lea.sflag [#allocation4], %s377
          %s379 = sand.u32 %s99, 1
          %s380 = smul.addr %s379, 8
          %s381 = scalar_lea.vmem [#allocation7], %s380
          %382 = dma.done %s378, 128
        $region52: #{tpu_custom_call.1} parent=47 // pred_fallthru
          _
        // Predicated region
        $region53: #{tpu_custom_call.1} parent=47 // pred_check
          %p383 = pneg %p142
        $region54: #{tpu_custom_call.1} parent=47 // pred_check_branch
          %385 = sbr.rel (%p383) target = $region56
        $region55: #{tpu_custom_call.1} parent=47 // pred_region
          %s386 = smul.u32 2, %s28
          %p387 = scmp.lt.s32.totalorder %s29, 1
          %s388 = scalar_select %p387, %s29, 1
          %p389 = scmp.lt.s32.totalorder %s386, 1
          %s390 = scalar_select %p389, %s386, 1
          %s391 = smul.addr %s388, 2
          %s392 = sadd.s32 %s390, %s391
          %s393 = smul.addr %s392, 4
          %s394 = scalar_lea.vmem %s3, %s393
        $region56: #{tpu_custom_call.1} parent=47 // pred_fallthru
          _
      $region48: #{tpu_custom_call.1} parent=5 // pred_fallthru
        _
    $region6: #{tpu_custom_call.1} parent=1 // loop_footer
      %s21 = sadd.s32 1, %s17
    $region7: #{tpu_custom_call.1} parent=1 // loop_footer_branch
      %16 = sbr.rel target = $region3
    $region8: #{tpu_custom_call.1} parent=1 // loop_exit
      _
    %395 = vsyncpa [#allocation3], 1
    %s396 = scalar_lea.sflag [#allocation3], 1
    %397 = vsyncpa %s396, 1
    %398 = vsyncpa [#allocation6], 1
    %399 = vsyncpa [#allocation4], 1
    %s400 = scalar_lea.sflag [#allocation4], 1
    %401 = vsyncpa %s400, 1

</llo_original>
